<compile_context>
chip_gen: v7x
topology: tpu7x:2x2x1
jax: 0.10.0
libtpu: 0.0.40
codegen_flags: <defaults>
</compile_context>

<pallas_src>
import jax
import jax.numpy as jnp
from jax import lax
from jax.experimental import pallas as pl
from jax.experimental.pallas import tpu as pltpu


_UNROLL = 8  # gather-loop unroll factor (edge_tile must be a multiple)


def _gelu_exact(x):
    # matches torch.nn.GELU() default (erf-based, not tanh approximation)
    return 0.5 * x * (1.0 + lax.erf(x * 0.7071067811865475))


# ---------------------------------------------------------------------------
# Stage A: depthwise SeparableFiberBundleConv message passing (scatter-add).
# Grid: edge chunks ('arbitrary').  The [N, P*C] output stays VMEM-resident
# and doubles as the scatter-add accumulator.
# ---------------------------------------------------------------------------
def _conv_kernel(src_ref, dst_ref,            # scalar prefetch (SMEM)
                 x_ref, kb_ref, wk_ref,       # inputs (VMEM)
                 xc_ref,                      # output / resident accumulator
                 kv_ref, msg_ref):            # VMEM scratch (Te, P*C) each
    step = pl.program_id(0)
    te = kb_ref.shape[0]

    @pl.when(step == 0)
    def _():
        xc_ref[...] = jnp.zeros_like(xc_ref)

    base = step * te

    # spatial kernel values for this edge chunk: [Te, P*K] @ [P*K, P*C]  (MXU)
    kv_ref[...] = jnp.dot(kb_ref[...], wk_ref[...],
                          preferred_element_type=jnp.float32)

    # Gather x[src] rows for the whole chunk (independent rows -> no RMW
    # hazard; manual 8x unroll exposes ILP to the LLO scheduler).
    def gather_body(j, carry):
        i0 = j * _UNROLL
        for u in range(_UNROLL):
            s = src_ref[base + i0 + u]
            msg_ref[pl.ds(i0 + u, 1), :] = x_ref[pl.ds(s, 1), :]
        return carry

    lax.fori_loop(0, te // _UNROLL, gather_body, 0)

    # message = x[src] * kernel(kernel_basis), vectorized over the full slab.
    # (zero-padded basis rows -> zero kv -> padded edges contribute nothing)
    msg_ref[...] = msg_ref[...] * kv_ref[...]

    # Scatter-add into the resident accumulator.  Inherently serial
    # read-modify-write (duplicate dst within a chunk must be ordered), so it
    # stays a plain per-edge loop.
    # TODO(synk): for very large graphs, replace with a dst-sorted,
    #             node-tiled segment-sum and DMA gather of x.
    def scatter_body(i, carry):
        d = dst_ref[base + i]
        xc_ref[pl.ds(d, 1), :] += msg_ref[pl.ds(i, 1), :]
        return carry

    lax.fori_loop(0, te, scatter_body, 0)


# ---------------------------------------------------------------------------
# Stage B: fiber contraction (+bias) -> LayerNorm(C) -> Linear -> GELU ->
#          Linear -> layer_scale -> residual.
# Grid: node tiles ('parallel'); weights resident, node tiles streamed.
# ---------------------------------------------------------------------------
def _node_kernel(xc_ref, xin_ref, ff_ref, cb_ref, mavg_ref, gam_ref, bet_ref,
                 w1_ref, b1_ref, w2_ref, b2_ref, ls_ref, out_ref):
    # fiber contraction 'boc,poc->bpc' / P folded into one MXU matmul against
    # a [P*C, P*C] block matrix (1/P folded in), plus the conv bias.
    x2 = jnp.dot(xc_ref[...], ff_ref[...],
                 preferred_element_type=jnp.float32) + cb_ref[...]
    # per-(node,fiber) mean / variance over C via a block-diagonal averaging
    # matmul (keeps the reduction on the MXU; lanes stay dense).
    mu = jnp.dot(x2, mavg_ref[...], preferred_element_type=jnp.float32)
    xm = x2 - mu
    var = jnp.dot(xm * xm, mavg_ref[...], preferred_element_type=jnp.float32)
    xn = xm * lax.rsqrt(var + 1e-5) * gam_ref[...] + bet_ref[...]
    # channel MLP (block-diagonal weights: contractions of P*C and P*H)
    h = jnp.dot(xn, w1_ref[...], preferred_element_type=jnp.float32) + b1_ref[...]
    h = _gelu_exact(h)
    y = jnp.dot(h, w2_ref[...], preferred_element_type=jnp.float32) + b2_ref[...]
    out_ref[...] = y * ls_ref[...] + xin_ref[...]


def separable_fiber_bundle_convnext(x, kernel_basis, fiber_kernel_basis,
                                    edge_index, params,
                                    *, edge_tile=256, node_tile=64):
    N, P, C = x.shape
    E = edge_index.shape[1]
    K = kernel_basis.shape[-1]
    H = params["W1"].shape[0]
    PC, PK, PH = P * C, P * K, P * H
    f32 = jnp.float32

    # -------- lane-dense 2-D slabs (all layout plumbing done here) ----------
    Tn = min(node_tile, N)
    Tn = max(8, (Tn // 8) * 8)
    N_pad = ((N + Tn - 1) // Tn) * Tn
    x2d = jnp.pad(x.astype(f32).reshape(N, PC), ((0, N_pad - N), (0, 0)))

    Te = max(_UNROLL, (edge_tile // _UNROLL) * _UNROLL)
    E_pad = ((E + Te - 1) // Te) * Te
    epad = E_pad - E
    src = jnp.pad(edge_index[0].astype(jnp.int32), (0, epad))
    dst = jnp.pad(edge_index[1].astype(jnp.int32), (0, epad))
    # zero-padded basis rows -> zero kernel values -> padded edges contribute 0
    kb2 = jnp.pad(kernel_basis.astype(f32).reshape(E, PK), ((0, epad), (0, 0)))

    # -------- small block-diagonal weight slabs (parameter preprocessing) ---
    eyeP = jnp.eye(P, dtype=f32)
    eyeC = jnp.eye(C, dtype=f32)
    wk_big = jnp.einsum('pq,kc->pkqc', eyeP,
                        params["Wk"].T.astype(f32)).reshape(PK, PC)
    fk = jnp.einsum('pok,ck->poc', fiber_kernel_basis.astype(f32),
                    params["Wfk"].astype(f32))
    ff_big = (jnp.einsum('poc,cd->ocpd', fk, eyeC) / P).reshape(PC, PC)
    cb = jnp.tile(params["conv_bias"].astype(f32), P).reshape(1, PC)

    mavg = jnp.einsum('pq,cd->pcqd', eyeP,
                      jnp.full((C, C), 1.0 / C, f32)).reshape(PC, PC)
    gam = jnp.tile(params["ln_gamma"].astype(f32), P).reshape(1, PC)
    bet = jnp.tile(params["ln_beta"].astype(f32), P).reshape(1, PC)
    w1_big = jnp.einsum('pq,cj->pcqj', eyeP,
                        params["W1"].T.astype(f32)).reshape(PC, PH)
    b1 = jnp.tile(params["b1"].astype(f32), P).reshape(1, PH)
    w2_big = jnp.einsum('pq,jc->pjqc', eyeP,
                        params["W2"].T.astype(f32)).reshape(PH, PC)
    b2 = jnp.tile(params["b2"].astype(f32), P).reshape(1, PC)
    ls = jnp.tile(params["layer_scale"].astype(f32), P).reshape(1, PC)

    # TODO(synk): bf16 MXU operands (with f32 accumulation) would roughly
    #             double MXU throughput; kept f32 to match reference exactly.

    # -------------------- stage A: message passing --------------------------
    xc = pl.pallas_call(
        _conv_kernel,
        out_shape=jax.ShapeDtypeStruct((N_pad, PC), f32),
        grid_spec=pltpu.PrefetchScalarGridSpec(
            num_scalar_prefetch=2,
            grid=(E_pad // Te,),
            in_specs=[
                pl.BlockSpec((N_pad, PC), lambda e, s, d: (0, 0)),  # x (resident)
                pl.BlockSpec((Te, PK),    lambda e, s, d: (e, 0)),  # basis chunk
                pl.BlockSpec((PK, PC),    lambda e, s, d: (0, 0)),  # spatial W
            ],
            out_specs=pl.BlockSpec((N_pad, PC), lambda e, s, d: (0, 0)),
            scratch_shapes=[pltpu.VMEM((Te, PC), f32),     # kernel values
                            pltpu.VMEM((Te, PC), f32)],    # messages
        ),
        compiler_params=pltpu.CompilerParams(
            dimension_semantics=("arbitrary",),
            vmem_limit_bytes=32 * 1024 * 1024),
    )(src, dst, x2d, kb2, wk_big)

    # ---- stage B: fiber mix -> LN -> MLP -> layer_scale -> residual --------
    const = lambda i: (0, 0)
    out2d = pl.pallas_call(
        _node_kernel,
        out_shape=jax.ShapeDtypeStruct((N_pad, PC), f32),
        grid=(N_pad // Tn,),
        in_specs=[
            pl.BlockSpec((Tn, PC), lambda i: (i, 0)),   # scatter-accum tile
            pl.BlockSpec((Tn, PC), lambda i: (i, 0)),   # residual input tile
            pl.BlockSpec((PC, PC), const),              # fiber kernel (block)
            pl.BlockSpec((1, PC), const),               # conv bias
            pl.BlockSpec((PC, PC), const),              # LN averaging matrix
            pl.BlockSpec((1, PC), const),               # gamma
            pl.BlockSpec((1, PC), const),               # beta
            pl.BlockSpec((PC, PH), const),              # W1 (block-diag)
            pl.BlockSpec((1, PH), const),               # b1
            pl.BlockSpec((PH, PC), const),              # W2 (block-diag)
            pl.BlockSpec((1, PC), const),               # b2
            pl.BlockSpec((1, PC), const),               # layer_scale
        ],
        out_specs=pl.BlockSpec((Tn, PC), lambda i: (i, 0)),
        compiler_params=pltpu.CompilerParams(
            dimension_semantics=("parallel",),
            vmem_limit_bytes=32 * 1024 * 1024),
    )(xc, x2d, ff_big, cb, mavg, gam, bet, w1_big, b1, w2_big, b2, ls)

    return out2d[:N].reshape(N, P, C)


def reference(x, kernel_basis, fiber_kernel_basis, edge_index, params):
    """Pure-JAX reference mirroring the PyTorch forward (eval, attention=False)."""
    src, dst = edge_index[0], edge_index[1]
    N, P, C = x.shape
    kv = jnp.einsum('epk,ck->epc', kernel_basis, params["Wk"])
    msg = x[src] * kv
    x1 = jnp.zeros((N, P, C), jnp.float32).at[dst].add(msg)
    fk = jnp.einsum('pok,ck->poc', fiber_kernel_basis, params["Wfk"])
    x2 = jnp.einsum('boc,poc->bpc', x1, fk) / fk.shape[-2] + params["conv_bias"]
    mu = jnp.mean(x2, -1, keepdims=True)
    var = jnp.mean((x2 - mu) ** 2, -1, keepdims=True)
    xn = (x2 - mu) / jnp.sqrt(var + 1e-5) * params["ln_gamma"] + params["ln_beta"]
    h = xn @ params["W1"].T + params["b1"]
    h = 0.5 * h * (1.0 + lax.erf(h * 0.7071067811865475))
    y = h @ params["W2"].T + params["b2"]
    return y * params["layer_scale"] + x


if __name__ == "__main__":
    # small shapes consistent with the module; P*C = 128 -> lane-dense slabs
    N, P, C, K = 128, 8, 16, 8       # nodes, orientations, channels, kernel_dim
    widening = 4
    H = widening * C
    deg = 8                          # incoming edges per node (dst covers all nodes)

    # deterministic edge_index: every node n receives edges from (n+o) % N
    dst = jnp.repeat(jnp.arange(N, dtype=jnp.int32), deg)
    src = (dst + jnp.tile(jnp.arange(deg, dtype=jnp.int32), N)) % N
    edge_index = jnp.stack([src, dst], axis=0)      # [2, E]
    E = edge_index.shape[1]

    key = jax.random.PRNGKey(0)
    ks = jax.random.split(key, 10)
    x = jax.random.normal(ks[0], (N, P, C), jnp.float32)
    kernel_basis = jax.random.normal(ks[1], (E, P, K), jnp.float32)
    fiber_kernel_basis = jax.random.normal(ks[2], (P, P, K), jnp.float32)

    # deterministic parameter init (shapes per the PyTorch __init__);
    # layer_scale set larger than the 1e-6 init so the check exercises the
    # full conv/LN/MLP path, not just the residual.
    params = dict(
        Wk=0.2 * jax.random.normal(ks[3], (C, K), jnp.float32),       # conv.kernel
        Wfk=0.2 * jax.random.normal(ks[4], (C, K), jnp.float32),      # conv.fiber_kernel
        conv_bias=jnp.zeros((C,), jnp.float32),                       # zero-init in module
        ln_gamma=jnp.ones((C,), jnp.float32),
        ln_beta=jnp.zeros((C,), jnp.float32),
        W1=0.2 * jax.random.normal(ks[5], (H, C), jnp.float32),
        b1=0.1 * jax.random.normal(ks[6], (H,), jnp.float32),
        W2=0.2 * jax.random.normal(ks[7], (C, H), jnp.float32),
        b2=0.1 * jax.random.normal(ks[8], (C,), jnp.float32),
        layer_scale=jnp.full((C,), 0.1, jnp.float32),
    )

    out = separable_fiber_bundle_convnext(
        x, kernel_basis, fiber_kernel_basis, edge_index, params,
        edge_tile=256, node_tile=64)
    out = jax.block_until_ready(out)

    ref = reference(x, kernel_basis, fiber_kernel_basis, edge_index, params)
    assert out.shape == (N, P, C)
    err = float(jnp.max(jnp.abs(out - ref)))
    assert jnp.allclose(out, ref, atol=1e-4, rtol=1e-4), err
    print("KERNEL_OK")
</pallas_src>

<mosaic_0001>
module attributes {stable_mosaic.version = 11 : i64} {
  func.func @_conv_kernel(%arg0: i32, %arg1: memref<1024xi32, #tpu.memory_space<smem>>, %arg2: memref<1024xi32, #tpu.memory_space<smem>>, %arg3: memref<128x128xf32, #tpu.memory_space<vmem>>, %arg4: memref<256x64xf32, #tpu.memory_space<vmem>>, %arg5: memref<64x128xf32, #tpu.memory_space<vmem>>, %arg6: memref<128x128xf32, #tpu.memory_space<vmem>>, %arg7: memref<256x128xf32, #tpu.memory_space<vmem>>, %arg8: memref<256x128xf32, #tpu.memory_space<vmem>>) attributes {dimension_semantics = [#tpu.dimension_semantics<arbitrary>], iteration_bounds = array<i64: 4>, scalar_prefetch = 2 : i64, scratch_operands = 2 : i64, tpu.core_type = #tpu.core_type<tc>, window_params = [{pipeline_mode = #tpu.pipeline_mode<synchronous>, transform_indices = @transform_0, window_bounds = array<i64: 128, 128>}, {transform_indices = @transform_1, window_bounds = array<i64: 256, 64>}, {pipeline_mode = #tpu.pipeline_mode<synchronous>, transform_indices = @transform_2, window_bounds = array<i64: 64, 128>}, {pipeline_mode = #tpu.pipeline_mode<synchronous>, transform_indices = @transform_3, window_bounds = array<i64: 128, 128>}]} {
    %c0_i32 = arith.constant 0 : i32
    %0 = arith.cmpi eq, %arg0, %c0_i32 : i32
    %1 = arith.extui %0 : i1 to i32
    %c0_i32_0 = arith.constant 0 : i32
    %2 = arith.cmpi ne, %1, %c0_i32_0 : i32
    scf.if %2 {
      %cst_18 = arith.constant 0.000000e+00 : f32
      %14 = vector.broadcast %cst_18 : f32 to vector<128x128xf32>
      %c0_19 = arith.constant 0 : index
      %c0_20 = arith.constant 0 : index
      %15 = vector.load %arg6[%c0_19, %c0_20] : memref<128x128xf32, #tpu.memory_space<vmem>>, vector<128x128xf32>
      tpu.vector_store %arg6[%c0_19, %c0_20], %14 {strides = array<i32>} : memref<128x128xf32, #tpu.memory_space<vmem>>, vector<128x128xf32>,
    } else {
    }
    %c256_i32 = arith.constant 256 : i32
    %3 = arith.muli %arg0, %c256_i32 : i32
    %c0 = arith.constant 0 : index
    %c0_1 = arith.constant 0 : index
    %4 = vector.load %arg4[%c0, %c0_1] : memref<256x64xf32, #tpu.memory_space<vmem>>, vector<256x64xf32>
    %c0_2 = arith.constant 0 : index
    %c0_3 = arith.constant 0 : index
    %5 = vector.load %arg5[%c0_2, %c0_3] : memref<64x128xf32, #tpu.memory_space<vmem>>, vector<64x128xf32>
    %cst = arith.constant dense<0.000000e+00> : vector<256x128xf32>
    %6 = tpu.matmul %4, %5, %cst {dimension_numbers = #tpu.dot_dimension_numbers<[1], [0], [0], [1], [0, 0, 1, 1], [], []>} : vector<256x64xf32>, vector<64x128xf32>, vector<256x128xf32> -> vector<256x128xf32>
    %c0_4 = arith.constant 0 : index
    %c0_5 = arith.constant 0 : index
    %7 = vector.load %arg7[%c0_4, %c0_5] : memref<256x128xf32, #tpu.memory_space<vmem>>, vector<256x128xf32>
    tpu.vector_store %arg7[%c0_4, %c0_5], %6 {strides = array<i32>} : memref<256x128xf32, #tpu.memory_space<vmem>>, vector<256x128xf32>,
    %c0_i32_6 = arith.constant 0 : i32
    %c32_i32 = arith.constant 32 : i32
    %8 = arith.addi %c0_i32_6, %c32_i32 : i32
    %c1_i32 = arith.constant 1 : i32
    scf.for %arg9 = %c0_i32_6 to %8 step %c1_i32  : i32 {
      %c8_i32 = arith.constant 8 : i32
      %14 = arith.muli %arg9, %c8_i32 : i32
      %15 = arith.addi %3, %14 : i32
      %c0_i32_18 = arith.constant 0 : i32
      %16 = arith.addi %15, %c0_i32_18 : i32
      %17 = arith.index_cast %16 : i32 to index
      %18 = memref.load %arg1[%17] : memref<1024xi32, #tpu.memory_space<smem>>
      %19 = arith.index_cast %18 : i32 to index
      %c0_19 = arith.constant 0 : index
      %20 = vector.load %arg3[%19, %c0_19] : memref<128x128xf32, #tpu.memory_space<vmem>>, vector<1x128xf32>
      %c0_i32_20 = arith.constant 0 : i32
      %21 = arith.addi %14, %c0_i32_20 : i32
      %22 = arith.index_cast %21 : i32 to index
      %c0_21 = arith.constant 0 : index
      %23 = vector.load %arg8[%22, %c0_21] : memref<256x128xf32, #tpu.memory_space<vmem>>, vector<1x128xf32>
      tpu.vector_store %arg8[%22, %c0_21], %20 {strides = array<i32>} : memref<256x128xf32, #tpu.memory_space<vmem>>, vector<1x128xf32>,
      %24 = arith.addi %3, %14 : i32
      %c1_i32_22 = arith.constant 1 : i32
      %25 = arith.addi %24, %c1_i32_22 : i32
      %26 = arith.index_cast %25 : i32 to index
      %27 = memref.load %arg1[%26] : memref<1024xi32, #tpu.memory_space<smem>>
      %28 = arith.index_cast %27 : i32 to index
      %c0_23 = arith.constant 0 : index
      %29 = vector.load %arg3[%28, %c0_23] : memref<128x128xf32, #tpu.memory_space<vmem>>, vector<1x128xf32>
      %c1_i32_24 = arith.constant 1 : i32
      %30 = arith.addi %14, %c1_i32_24 : i32
      %31 = arith.index_cast %30 : i32 to index
      %c0_25 = arith.constant 0 : index
      %32 = vector.load %arg8[%31, %c0_25] : memref<256x128xf32, #tpu.memory_space<vmem>>, vector<1x128xf32>
      tpu.vector_store %arg8[%31, %c0_25], %29 {strides = array<i32>} : memref<256x128xf32, #tpu.memory_space<vmem>>, vector<1x128xf32>,
      %33 = arith.addi %3, %14 : i32
      %c2_i32 = arith.constant 2 : i32
      %34 = arith.addi %33, %c2_i32 : i32
      %35 = arith.index_cast %34 : i32 to index
      %36 = memref.load %arg1[%35] : memref<1024xi32, #tpu.memory_space<smem>>
      %37 = arith.index_cast %36 : i32 to index
      %c0_26 = arith.constant 0 : index
      %38 = vector.load %arg3[%37, %c0_26] : memref<128x128xf32, #tpu.memory_space<vmem>>, vector<1x128xf32>
      %c2_i32_27 = arith.constant 2 : i32
      %39 = arith.addi %14, %c2_i32_27 : i32
      %40 = arith.index_cast %39 : i32 to index
      %c0_28 = arith.constant 0 : index
      %41 = vector.load %arg8[%40, %c0_28] : memref<256x128xf32, #tpu.memory_space<vmem>>, vector<1x128xf32>
      tpu.vector_store %arg8[%40, %c0_28], %38 {strides = array<i32>} : memref<256x128xf32, #tpu.memory_space<vmem>>, vector<1x128xf32>,
      %42 = arith.addi %3, %14 : i32
      %c3_i32 = arith.constant 3 : i32
      %43 = arith.addi %42, %c3_i32 : i32
      %44 = arith.index_cast %43 : i32 to index
      %45 = memref.load %arg1[%44] : memref<1024xi32, #tpu.memory_space<smem>>
      %46 = arith.index_cast %45 : i32 to index
      %c0_29 = arith.constant 0 : index
      %47 = vector.load %arg3[%46, %c0_29] : memref<128x128xf32, #tpu.memory_space<vmem>>, vector<1x128xf32>
      %c3_i32_30 = arith.constant 3 : i32
      %48 = arith.addi %14, %c3_i32_30 : i32
      %49 = arith.index_cast %48 : i32 to index
      %c0_31 = arith.constant 0 : index
      %50 = vector.load %arg8[%49, %c0_31] : memref<256x128xf32, #tpu.memory_space<vmem>>, vector<1x128xf32>
      tpu.vector_store %arg8[%49, %c0_31], %47 {strides = array<i32>} : memref<256x128xf32, #tpu.memory_space<vmem>>, vector<1x128xf32>,
      %51 = arith.addi %3, %14 : i32
      %c4_i32 = arith.constant 4 : i32
      %52 = arith.addi %51, %c4_i32 : i32
      %53 = arith.index_cast %52 : i32 to index
      %54 = memref.load %arg1[%53] : memref<1024xi32, #tpu.memory_space<smem>>
      %55 = arith.index_cast %54 : i32 to index
      %c0_32 = arith.constant 0 : index
      %56 = vector.load %arg3[%55, %c0_32] : memref<128x128xf32, #tpu.memory_space<vmem>>, vector<1x128xf32>
      %c4_i32_33 = arith.constant 4 : i32
      %57 = arith.addi %14, %c4_i32_33 : i32
      %58 = arith.index_cast %57 : i32 to index
      %c0_34 = arith.constant 0 : index
      %59 = vector.load %arg8[%58, %c0_34] : memref<256x128xf32, #tpu.memory_space<vmem>>, vector<1x128xf32>
      tpu.vector_store %arg8[%58, %c0_34], %56 {strides = array<i32>} : memref<256x128xf32, #tpu.memory_space<vmem>>, vector<1x128xf32>,
      %60 = arith.addi %3, %14 : i32
      %c5_i32 = arith.constant 5 : i32
      %61 = arith.addi %60, %c5_i32 : i32
      %62 = arith.index_cast %61 : i32 to index
      %63 = memref.load %arg1[%62] : memref<1024xi32, #tpu.memory_space<smem>>
      %64 = arith.index_cast %63 : i32 to index
      %c0_35 = arith.constant 0 : index
      %65 = vector.load %arg3[%64, %c0_35] : memref<128x128xf32, #tpu.memory_space<vmem>>, vector<1x128xf32>
      %c5_i32_36 = arith.constant 5 : i32
      %66 = arith.addi %14, %c5_i32_36 : i32
      %67 = arith.index_cast %66 : i32 to index
      %c0_37 = arith.constant 0 : index
      %68 = vector.load %arg8[%67, %c0_37] : memref<256x128xf32, #tpu.memory_space<vmem>>, vector<1x128xf32>
      tpu.vector_store %arg8[%67, %c0_37], %65 {strides = array<i32>} : memref<256x128xf32, #tpu.memory_space<vmem>>, vector<1x128xf32>,
      %69 = arith.addi %3, %14 : i32
      %c6_i32 = arith.constant 6 : i32
      %70 = arith.addi %69, %c6_i32 : i32
      %71 = arith.index_cast %70 : i32 to index
      %72 = memref.load %arg1[%71] : memref<1024xi32, #tpu.memory_space<smem>>
      %73 = arith.index_cast %72 : i32 to index
      %c0_38 = arith.constant 0 : index
      %74 = vector.load %arg3[%73, %c0_38] : memref<128x128xf32, #tpu.memory_space<vmem>>, vector<1x128xf32>
      %c6_i32_39 = arith.constant 6 : i32
      %75 = arith.addi %14, %c6_i32_39 : i32
      %76 = arith.index_cast %75 : i32 to index
      %c0_40 = arith.constant 0 : index
      %77 = vector.load %arg8[%76, %c0_40] : memref<256x128xf32, #tpu.memory_space<vmem>>, vector<1x128xf32>
      tpu.vector_store %arg8[%76, %c0_40], %74 {strides = array<i32>} : memref<256x128xf32, #tpu.memory_space<vmem>>, vector<1x128xf32>,
      %78 = arith.addi %3, %14 : i32
      %c7_i32 = arith.constant 7 : i32
      %79 = arith.addi %78, %c7_i32 : i32
      %80 = arith.index_cast %79 : i32 to index
      %81 = memref.load %arg1[%80] : memref<1024xi32, #tpu.memory_space<smem>>
      %82 = arith.index_cast %81 : i32 to index
      %c0_41 = arith.constant 0 : index
      %83 = vector.load %arg3[%82, %c0_41] : memref<128x128xf32, #tpu.memory_space<vmem>>, vector<1x128xf32>
      %c7_i32_42 = arith.constant 7 : i32
      %84 = arith.addi %14, %c7_i32_42 : i32
      %85 = arith.index_cast %84 : i32 to index
      %c0_43 = arith.constant 0 : index
      %86 = vector.load %arg8[%85, %c0_43] : memref<256x128xf32, #tpu.memory_space<vmem>>, vector<1x128xf32>
      tpu.vector_store %arg8[%85, %c0_43], %83 {strides = array<i32>} : memref<256x128xf32, #tpu.memory_space<vmem>>, vector<1x128xf32>,
    }
    %c32_i32_7 = arith.constant 32 : i32
    %c0_8 = arith.constant 0 : index
    %c0_9 = arith.constant 0 : index
    %9 = vector.load %arg8[%c0_8, %c0_9] : memref<256x128xf32, #tpu.memory_space<vmem>>, vector<256x128xf32>
    %c0_10 = arith.constant 0 : index
    %c0_11 = arith.constant 0 : index
    %10 = vector.load %arg7[%c0_10, %c0_11] : memref<256x128xf32, #tpu.memory_space<vmem>>, vector<256x128xf32>
    %11 = arith.mulf %9, %10 : vector<256x128xf32>
    %c0_12 = arith.constant 0 : index
    %c0_13 = arith.constant 0 : index
    %12 = vector.load %arg8[%c0_12, %c0_13] : memref<256x128xf32, #tpu.memory_space<vmem>>, vector<256x128xf32>
    tpu.vector_store %arg8[%c0_12, %c0_13], %11 {strides = array<i32>} : memref<256x128xf32, #tpu.memory_space<vmem>>, vector<256x128xf32>,
    %c0_i32_14 = arith.constant 0 : i32
    %c256_i32_15 = arith.constant 256 : i32
    %13 = arith.addi %c0_i32_14, %c256_i32_15 : i32
    %c1_i32_16 = arith.constant 1 : i32
    scf.for %arg9 = %c0_i32_14 to %13 step %c1_i32_16  : i32 {
      %14 = arith.addi %3, %arg9 : i32
      %15 = arith.index_cast %14 : i32 to index
      %16 = memref.load %arg2[%15] : memref<1024xi32, #tpu.memory_space<smem>>
      %17 = arith.index_cast %16 : i32 to index
      %c0_18 = arith.constant 0 : index
      %18 = vector.load %arg6[%17, %c0_18] : memref<128x128xf32, #tpu.memory_space<vmem>>, vector<1x128xf32>
      %19 = arith.index_cast %arg9 : i32 to index
      %c0_19 = arith.constant 0 : index
      %20 = vector.load %arg8[%19, %c0_19] : memref<256x128xf32, #tpu.memory_space<vmem>>, vector<1x128xf32>
      %21 = arith.addf %18, %20 : vector<1x128xf32>
      %22 = arith.index_cast %16 : i32 to index
      %c0_20 = arith.constant 0 : index
      %23 = vector.load %arg6[%22, %c0_20] : memref<128x128xf32, #tpu.memory_space<vmem>>, vector<1x128xf32>
      tpu.vector_store %arg6[%22, %c0_20], %21 {strides = array<i32>} : memref<128x128xf32, #tpu.memory_space<vmem>>, vector<1x128xf32>,
    }
    %c256_i32_17 = arith.constant 256 : i32
    return
  }
  func.func @transform_0(%arg0: i32, %arg1: memref<1024xi32, #tpu.memory_space<smem>>, %arg2: memref<1024xi32, #tpu.memory_space<smem>>) -> (i32, i32) {
    %c0_i32 = arith.constant 0 : i32
    %c0_i32_0 = arith.constant 0 : i32
    %c0_i32_1 = arith.constant 0 : i32
    return %c0_i32, %c0_i32_0 : i32, i32
  }
  func.func @transform_1(%arg0: i32, %arg1: memref<1024xi32, #tpu.memory_space<smem>>, %arg2: memref<1024xi32, #tpu.memory_space<smem>>) -> (i32, i32) {
    %c0_i32 = arith.constant 0 : i32
    %c0_i32_0 = arith.constant 0 : i32
    return %arg0, %c0_i32 : i32, i32
  }
  func.func @transform_2(%arg0: i32, %arg1: memref<1024xi32, #tpu.memory_space<smem>>, %arg2: memref<1024xi32, #tpu.memory_space<smem>>) -> (i32, i32) {
    %c0_i32 = arith.constant 0 : i32
    %c0_i32_0 = arith.constant 0 : i32
    %c0_i32_1 = arith.constant 0 : i32
    return %c0_i32, %c0_i32_0 : i32, i32
  }
  func.func @transform_3(%arg0: i32, %arg1: memref<1024xi32, #tpu.memory_space<smem>>, %arg2: memref<1024xi32, #tpu.memory_space<smem>>) -> (i32, i32) {
    %c0_i32 = arith.constant 0 : i32
    %c0_i32_0 = arith.constant 0 : i32
    %c0_i32_1 = arith.constant 0 : i32
    return %c0_i32, %c0_i32_0 : i32, i32
  }
}

</mosaic_0001>

<llo_original>
// kernel: tpu_custom_call.1
$region0: #{tpu_custom_call.1}
  #allocation0 [shape = 'u32[]', space=smem, size = 0x4, offset = 0x4, fixed_abs, tag = 'smem constant byte address 0x4 - core index']
  #allocation1 [shape = 'u32[144,128]{1,0:T(1,128)}', space=vmem, size = 0x12000, scoped, tag = 'internal scratch']
  #allocation2 [shape = 'f32[256,128]{1,0:T(8,128)}', space=vmem, size = 0x20000, scoped, tag = 'scratch operand']
  #allocation3 [shape = 'f32[256,128]{1,0:T(8,128)}', space=vmem, size = 0x20000, scoped, tag = 'scratch operand']
  #allocation4 [shape = 's32[1]{0}', space=sflag, size = 0x4, scoped, tag = 'scoped memory for tpu_custom_call.1']
  #allocation5 [shape = 'u8[4096]{0}', space=smem, size = 0x1000, scoped, tag = 'prefetched SMEM operand 0']
  #allocation6 [shape = 'u8[4096]{0}', space=smem, size = 0x1000, scoped, tag = 'prefetched SMEM operand 1']
  %s0 = inlined_call_operand.vmem [shape: s32[1024], index: 0, kind: input, shape index: {}]
  %s1 = inlined_call_operand.vmem [shape: s32[1024], index: 1, kind: input, shape index: {}]
  %s2 = inlined_call_operand.vmem [shape: f32[128,128], index: 2, kind: input, shape index: {}]
  %s3 = inlined_call_operand.vmem [shape: f32[1024,64], index: 3, kind: input, shape index: {}]
  %s4 = inlined_call_operand.vmem [shape: f32[64,128], index: 4, kind: input, shape index: {}]
  %s5 = inlined_call_operand.hbm [shape: f32[128,128], index: 5, kind: output, shape index: {}]
  %s6 = sld [smem:[#allocation0]]
  $region63: #{tpu_custom_call.1} parent=0
    _
  %s8 = ssub.s32 1, %s6
  %s9 = scalar_select 0, %s8, %s6
  %s10 = sshll.u32 %s0, 4
  %s11 = int_to_ptr.vmem [resolvable:$true] %s10
  %13 = dma.vmem_to_smem %s11, 128, [#allocation5], [#allocation4]
  %s14 = sshll.u32 %s1, 4
  %s15 = int_to_ptr.vmem [resolvable:$true] %s14
  %17 = dma.vmem_to_smem %s15, 128, [#allocation6], [#allocation4]
  %18 = dma.done [#allocation4], 256
  %19 = sfence
  $region1: #{tpu_custom_call.1} parent=0
    #allocation7 [shape = 'u8[65536]{0}', space=vmem, size = 0x10000, scoped, tag = 'output window, operand 0, single buffered']
    #allocation8 [shape = 's32[2]{0}', space=sflag, size = 0x8, scoped, tag = 'scoped memory for tpu_custom_call.1']
    %20 = vsyncpa [#allocation8], 0
    loop: start=0, step=1, limit=6
    $region2: #{tpu_custom_call.1} parent=1 // loop_pre_header
      _
    $region3: #{tpu_custom_call.1} parent=1 // loop_header
      %s22 = sphi 0, %s26
      %p23 = scmp.ge.s32.totalorder %s22, 6
      %s30 = sphi 0, %s30
      %s32 = sphi 0, %s30
      %s33 = sphi 0, %s32
      %s47 = sphi 0, %s33
      %s53 = sphi 0, %s55
      %s56 = sphi 0, %s53
      %s57 = sphi 0, %s56
      %s73 = sphi 0, %s57
      %s77 = sphi 0, %s77
      %s79 = sphi 0, %s77
      %s80 = sphi 0, %s79
      %s94 = sphi 0, %s80
      %s98 = sphi 0, %s98
      %s100 = sphi 0, %s98
      %s101 = sphi 0, %s100
      %s115 = sphi 0, %s101
    $region4: #{tpu_custom_call.1} parent=1 // loop_header_branch
      %25 = sbr.rel (%p23) target = $region8
    $region5: #{tpu_custom_call.1} parent=1 // loop_body
      %s27 = ssub.s32 %s22, 1
      %s28 = ssub.s32 %s22, 2
      %s29 = sadd.s32 %s22, 1
      %s31 = sadd.s32 %s30, 1
      %p34 = scmp.eq.s32.totalorder %s22, 3
      %p35 = scmp.ne.s32.totalorder %s30, %s32
      %p36 = scmp.eq.s32.totalorder %s22, 0
      %p37 = por %p35, %p36
      %p38 = scmp.ne.s32.totalorder %s30, %s32
      %p39 = scmp.eq.s32.totalorder %s27, 3
      %p40 = por %p38, %p39
      %p41 = scmp.ne.s32.totalorder %s32, %s33
      %p42 = scmp.eq.s32.totalorder %s27, 0
      %p43 = por %p41, %p42
      %p44 = scmp.ne.s32.totalorder %s32, %s33
      %p45 = scmp.eq.s32.totalorder %s28, 3
      %p46 = por %p44, %p45
      %p48 = scmp.ne.s32.totalorder %s33, %s47
      %p49 = scmp.eq.s32.totalorder %s28, 0
      %p50 = por %p48, %p49
      %s51 = ssub.s32 %s22, %s29
      %p52 = scmp.eq.s32.totalorder %s51, 0
      %s54 = sadd.s32 %s53, 1
      %s55 = scalar_select %p52, %s53, %s54
      %p58 = pneg %p52
      %p59 = scmp.eq.s32.totalorder %s22, 3
      %p60 = por %p58, %p59
      %p61 = scmp.ne.s32.totalorder %s53, %s56
      %p62 = scmp.eq.s32.totalorder %s22, 0
      %p63 = por %p61, %p62
      %p64 = scmp.ne.s32.totalorder %s53, %s56
      %p65 = scmp.eq.s32.totalorder %s27, 3
      %p66 = por %p64, %p65
      %p67 = scmp.ne.s32.totalorder %s56, %s57
      %p68 = scmp.eq.s32.totalorder %s27, 0
      %p69 = por %p67, %p68
      %p70 = scmp.ne.s32.totalorder %s56, %s57
      %p71 = scmp.eq.s32.totalorder %s28, 3
      %p72 = por %p70, %p71
      %p74 = scmp.ne.s32.totalorder %s57, %s73
      %p75 = scmp.eq.s32.totalorder %s28, 0
      %p76 = por %p74, %p75
      %s78 = sadd.s32 %s77, 1
      %p81 = scmp.eq.s32.totalorder %s22, 3
      %p82 = scmp.ne.s32.totalorder %s77, %s79
      %p83 = scmp.eq.s32.totalorder %s22, 0
      %p84 = por %p82, %p83
      %p85 = scmp.ne.s32.totalorder %s77, %s79
      %p86 = scmp.eq.s32.totalorder %s27, 3
      %p87 = por %p85, %p86
      %p88 = scmp.ne.s32.totalorder %s79, %s80
      %p89 = scmp.eq.s32.totalorder %s27, 0
      %p90 = por %p88, %p89
      %p91 = scmp.ne.s32.totalorder %s79, %s80
      %p92 = scmp.eq.s32.totalorder %s28, 3
      %p93 = por %p91, %p92
      %p95 = scmp.ne.s32.totalorder %s80, %s94
      %p96 = scmp.eq.s32.totalorder %s28, 0
      %p97 = por %p95, %p96
      %s99 = sadd.s32 %s98, 1
      %p102 = scmp.eq.s32.totalorder %s22, 3
      %p103 = scmp.ne.s32.totalorder %s98, %s100
      %p104 = scmp.eq.s32.totalorder %s22, 0
      %p105 = por %p103, %p104
      %p106 = scmp.ne.s32.totalorder %s98, %s100
      %p107 = scmp.eq.s32.totalorder %s27, 3
      %p108 = por %p106, %p107
      %p109 = scmp.ne.s32.totalorder %s100, %s101
      %p110 = scmp.eq.s32.totalorder %s27, 0
      %p111 = por %p109, %p110
      %p112 = scmp.ne.s32.totalorder %s100, %s101
      %p113 = scmp.eq.s32.totalorder %s28, 3
      %p114 = por %p112, %p113
      %p116 = scmp.ne.s32.totalorder %s101, %s115
      %p117 = scmp.eq.s32.totalorder %s28, 0
      %p118 = por %p116, %p117
      %p119 = scmp.le.s32.totalorder 1, %s22
      %p120 = scmp.lt.s32.totalorder %s22, 5
      %p121 = pnand %p119, %p120
      %p122 = pneg %p121
      // Predicated region
      $region9: #{tpu_custom_call.1} parent=5 // pred_check
        _
      $region10: #{tpu_custom_call.1} parent=5 // pred_check_branch
        %124 = sbr.rel (%p121) target = $region12
      $region11: #{tpu_custom_call.1} parent=5 // pred_region
        %s125 = ssub.s32 %s22, 1
        // Predicated region
        $region13: #{tpu_custom_call.1} parent=11 // pred_check
          %p126 = pneg %p43
        $region14: #{tpu_custom_call.1} parent=11 // pred_check_branch
          %128 = sbr.rel (%p126) target = $region16
        $region15: #{tpu_custom_call.1} parent=11 // pred_region
          _
        $region16: #{tpu_custom_call.1} parent=11 // pred_fallthru
          _
        // Predicated region
        $region17: #{tpu_custom_call.1} parent=11 // pred_check
          %p129 = pneg %p90
        $region18: #{tpu_custom_call.1} parent=11 // pred_check_branch
          %131 = sbr.rel (%p129) target = $region20
        $region19: #{tpu_custom_call.1} parent=11 // pred_region
          _
        $region20: #{tpu_custom_call.1} parent=11 // pred_fallthru
          _
      $region12: #{tpu_custom_call.1} parent=5 // pred_fallthru
        _
      %p132 = scmp.lt.s32.totalorder %s22, 4
      // Predicated region
      $region21: #{tpu_custom_call.1} parent=5 // pred_check
        %p133 = pneg %p132
      $region22: #{tpu_custom_call.1} parent=5 // pred_check_branch
        %135 = sbr.rel (%p133) target = $region24
      $region23: #{tpu_custom_call.1} parent=5 // pred_region
        // Predicated region
        $region25: #{tpu_custom_call.1} parent=23 // pred_check
          %p136 = pneg %p63
        $region26: #{tpu_custom_call.1} parent=23 // pred_check_branch
          %138 = sbr.rel (%p136) target = $region28
        $region27: #{tpu_custom_call.1} parent=23 // pred_region
          %s139 = smul.u32 32, %s22
          %p140 = scmp.lt.s32.totalorder %s139, 127
          %s141 = scalar_select %p140, %s139, 127
          %s142 = smul.addr %s141, 8
          %s143 = scalar_lea.vmem %s3, %s142
          %s144 = smul.u32 32, %s22
        $region28: #{tpu_custom_call.1} parent=23 // pred_fallthru
          _
      $region24: #{tpu_custom_call.1} parent=5 // pred_fallthru
        _
      %p145 = scmp.le.s32.totalorder 1, %s22
      %p146 = scmp.lt.s32.totalorder %s22, 5
      %p147 = pnand %p145, %p146
      %p148 = pneg %p147
      // Predicated region
      $region29: #{tpu_custom_call.1} parent=5 // pred_check
        _
      $region30: #{tpu_custom_call.1} parent=5 // pred_check_branch
        %150 = sbr.rel (%p147) target = $region32
      $region31: #{tpu_custom_call.1} parent=5 // pred_region
        %s151 = ssub.s32 %s22, 1
        %p152 = pneg %p43
        %p153 = pneg %p40
        %s154 = smul.u32 32, %s27
        %p155 = scmp.lt.s32.totalorder %s154, 127
        %s156 = scalar_select %p155, %s154, 127
        %s157 = smul.addr %s156, 8
        %s158 = scalar_lea.vmem %s3, %s157
        %p159 = pneg %p69
        %p160 = pneg %p66
        %p161 = pneg %p90
        %p162 = pneg %p87
        %p163 = pneg %p111
        %p164 = pneg %p108
        %s165 = smul.u32 32, %s27
        %p166 = scmp.lt.s32.totalorder %s165, 127
        %s167 = scalar_select %p166, %s165, 127
        %s168 = smul.addr %s167, 8
        %s169 = scalar_lea.vmem %s3, %s168
        %s170 = smul.u32 32, %s27
        %p171 = scmp.eq.s32.totalorder %s27, 0
        // Predicated region
        $region33: #{tpu_custom_call.1} parent=31 // pred_check
          %p172 = pneg %p171
        $region34: #{tpu_custom_call.1} parent=31 // pred_check_branch
          %174 = sbr.rel (%p172) target = $region36
        $region35: #{tpu_custom_call.1} parent=31 // pred_region
          %175 = vst [vmem:[#allocation7] sm:$0xff] 0.0
          %176 = vst [vmem:[#allocation7 + $0x8] sm:$0xff] 0.0
          %177 = vst [vmem:[#allocation7 + $0x10] sm:$0xff] 0.0
          %178 = vst [vmem:[#allocation7 + $0x18] sm:$0xff] 0.0
          %179 = vst [vmem:[#allocation7 + $0x20] sm:$0xff] 0.0
          %180 = vst [vmem:[#allocation7 + $0x28] sm:$0xff] 0.0
          %181 = vst [vmem:[#allocation7 + $0x30] sm:$0xff] 0.0
          %182 = vst [vmem:[#allocation7 + $0x38] sm:$0xff] 0.0
          %183 = vst [vmem:[#allocation7 + $0x40] sm:$0xff] 0.0
          %184 = vst [vmem:[#allocation7 + $0x48] sm:$0xff] 0.0
          %185 = vst [vmem:[#allocation7 + $0x50] sm:$0xff] 0.0
          %186 = vst [vmem:[#allocation7 + $0x58] sm:$0xff] 0.0
          %187 = vst [vmem:[#allocation7 + $0x60] sm:$0xff] 0.0
          %188 = vst [vmem:[#allocation7 + $0x68] sm:$0xff] 0.0
          %189 = vst [vmem:[#allocation7 + $0x70] sm:$0xff] 0.0
          %190 = vst [vmem:[#allocation7 + $0x78] sm:$0xff] 0.0
        $region36: #{tpu_custom_call.1} parent=31 // pred_fallthru
          _
        %s191 = smul.u32 %s27, 256
        %v192 = vld [vmem:[%s169] sm:$0xff]
        %v193 = vld [vmem:[%s169 + $0x8] sm:$0xff]
        %v194 = vld [vmem:[%s169 + $0x10] sm:$0xff]
        %v195 = vld [vmem:[%s169 + $0x18] sm:$0xff]
        %v196 = vld [vmem:[%s169 + $0x20] sm:$0xff]
        %v197 = vld [vmem:[%s169 + $0x28] sm:$0xff]
        %v198 = vld [vmem:[%s169 + $0x30] sm:$0xff]
        %v199 = vld [vmem:[%s169 + $0x38] sm:$0xff]
        %v200 = vld [vmem:[%s169 + $0x40] sm:$0xff]
        %v201 = vld [vmem:[%s169 + $0x48] sm:$0xff]
        %v202 = vld [vmem:[%s169 + $0x50] sm:$0xff]
        %v203 = vld [vmem:[%s169 + $0x58] sm:$0xff]
        %v204 = vld [vmem:[%s169 + $0x60] sm:$0xff]
        %v205 = vld [vmem:[%s169 + $0x68] sm:$0xff]
        %v206 = vld [vmem:[%s169 + $0x70] sm:$0xff]
        %v207 = vld [vmem:[%s169 + $0x78] sm:$0xff]
        %v208 = vld [vmem:[%s169 + $0x80] sm:$0xff]
        %v209 = vld [vmem:[%s169 + $0x88] sm:$0xff]
        %v210 = vld [vmem:[%s169 + $0x90] sm:$0xff]
        %v211 = vld [vmem:[%s169 + $0x98] sm:$0xff]
        %v212 = vld [vmem:[%s169 + $0xa0] sm:$0xff]
        %v213 = vld [vmem:[%s169 + $0xa8] sm:$0xff]
        %v214 = vld [vmem:[%s169 + $0xb0] sm:$0xff]
        %v215 = vld [vmem:[%s169 + $0xb8] sm:$0xff]
        %v216 = vld [vmem:[%s169 + $0xc0] sm:$0xff]
        %v217 = vld [vmem:[%s169 + $0xc8] sm:$0xff]
        %v218 = vld [vmem:[%s169 + $0xd0] sm:$0xff]
        %v219 = vld [vmem:[%s169 + $0xd8] sm:$0xff]
        %v220 = vld [vmem:[%s169 + $0xe0] sm:$0xff]
        %v221 = vld [vmem:[%s169 + $0xe8] sm:$0xff]
        %v222 = vld [vmem:[%s169 + $0xf0] sm:$0xff]
        %v223 = vld [vmem:[%s169 + $0xf8] sm:$0xff]
        %v224 = vld [vmem:[%s4] sm:$0xff]
        %v225 = vld [vmem:[%s4 + $0x8] sm:$0xff]
        %v226 = vld [vmem:[%s4 + $0x10] sm:$0xff]
        %v227 = vld [vmem:[%s4 + $0x18] sm:$0xff]
        %v228 = vld [vmem:[%s4 + $0x20] sm:$0xff]
        %v229 = vld [vmem:[%s4 + $0x28] sm:$0xff]
        %v230 = vld [vmem:[%s4 + $0x30] sm:$0xff]
        %v231 = vld [vmem:[%s4 + $0x38] sm:$0xff]
        %vm232 = vcmask 523264
        %v234 = vsel %vm232, %v192, 0
        %v237 = vsel %vm232, %v193, 0
        %v240 = vsel %vm232, %v194, 0
        %v243 = vsel %vm232, %v195, 0
        %v246 = vsel %vm232, %v196, 0
        %v249 = vsel %vm232, %v197, 0
        %v252 = vsel %vm232, %v198, 0
        %v255 = vsel %vm232, %v199, 0
        %v258 = vsel %vm232, %v200, 0
        %v261 = vsel %vm232, %v201, 0
        %v264 = vsel %vm232, %v202, 0
        %v267 = vsel %vm232, %v203, 0
        %v270 = vsel %vm232, %v204, 0
        %v273 = vsel %vm232, %v205, 0
        %v276 = vsel %vm232, %v206, 0
        %v279 = vsel %vm232, %v207, 0
        %v282 = vsel %vm232, %v208, 0
        %v285 = vsel %vm232, %v209, 0
        %v288 = vsel %vm232, %v210, 0
        %v291 = vsel %vm232, %v211, 0
        %v294 = vsel %vm232, %v212, 0
        %v297 = vsel %vm232, %v213, 0
        %v300 = vsel %vm232, %v214, 0
        %v303 = vsel %vm232, %v215, 0
        %v306 = vsel %vm232, %v216, 0
        %v309 = vsel %vm232, %v217, 0
        %v312 = vsel %vm232, %v218, 0
        %v315 = vsel %vm232, %v219, 0
        %v318 = vsel %vm232, %v220, 0
        %v321 = vsel %vm232, %v221, 0
        %v324 = vsel %vm232, %v222, 0
        %v327 = vsel %vm232, %v223, 0
        %329 = vmatprep.subr.mxu0 0.0
        %330 = vmatpush1.msra.mxu0 %v224
        %331 = vmatprep.subr.mxu0 0.0
        %332 = vmatpush1.msra.mxu0 %v225
        %333 = vmatprep.subr.mxu0 0.0
        %334 = vmatpush1.msra.mxu0 %v226
        %335 = vmatprep.subr.mxu0 0.0
        %336 = vmatpush1.msra.mxu0 %v227
        %337 = vmatprep.subr.mxu0 0.0
        %338 = vmatpush1.msra.mxu0 %v228
        %339 = vmatprep.subr.mxu0 0.0
        %340 = vmatpush1.msra.mxu0 %v229
        %341 = vmatprep.subr.mxu0 0.0
        %342 = vmatpush1.msra.mxu0 %v230
        %343 = vmatprep.subr.mxu0 0.0
        %344 = vmatpush1.msra.mxu0 %v231
        %345 = vmatprep.subr.mxu0 0.0
        %346 = vmatpush1.msra.mxu0 0.0
        %347 = vmatprep.subr.mxu0 0.0
        %348 = vmatpush1.msra.mxu0 0.0
        %349 = vmatprep.subr.mxu0 0.0
        %350 = vmatpush1.msra.mxu0 0.0
        %351 = vmatprep.subr.mxu0 0.0
        %352 = vmatpush1.msra.mxu0 0.0
        %353 = vmatprep.subr.mxu0 0.0
        %354 = vmatpush1.msra.mxu0 0.0
        %355 = vmatprep.subr.mxu0 0.0
        %356 = vmatpush1.msra.mxu0 0.0
        %357 = vmatprep.subr.mxu0 0.0
        %358 = vmatpush1.msra.mxu0 0.0
        %359 = vmatprep.subr.mxu0 0.0
        %360 = vmatpush1.msra.mxu0 0.0
        %361 = vmatprep.subr.mxu0 0.0
        %362 = vmatpush1.msra.mxu0 0.0
        %363 = vmatprep.subr.mxu0 0.0
        %364 = vmatpush1.msra.mxu0 0.0
        %365 = vmatprep.subr.mxu0 0.0
        %366 = vmatpush1.msra.mxu0 0.0
        %367 = vmatprep.subr.mxu0 0.0
        %368 = vmatpush1.msra.mxu0 0.0
        %369 = vmatprep.subr.mxu0 0.0
        %370 = vmatpush1.msra.mxu0 0.0
        %371 = vmatprep.subr.mxu0 0.0
        %372 = vmatpush1.msra.mxu0 0.0
        %373 = vmatprep.subr.mxu0 0.0
        %374 = vmatpush1.msra.mxu0 0.0
        %375 = vmatprep.subr.mxu0 0.0
        %376 = vmatpush1.msra.mxu0 0.0
        %377 = vmatprep.subr.mxu0 0.0
        %378 = vmatpush1.msra.mxu0 0.0
        %379 = vmatprep.subr.mxu0 0.0
        %380 = vmatpush1.msra.mxu0 0.0
        %381 = vmatprep.subr.mxu0 0.0
        %382 = vmatpush1.msra.mxu0 0.0
        %383 = vmatprep.subr.mxu0 0.0
        %384 = vmatpush1.msra.mxu0 0.0
        %385 = vmatprep.subr.mxu0 0.0
        %386 = vmatpush1.msra.mxu0 0.0
        %387 = vmatprep.subr.mxu0 0.0
        %388 = vmatpush1.msra.mxu0 0.0
        %389 = vmatprep.subr.mxu0 0.0
        %390 = vmatpush1.msra.mxu0 0.0
        %391 = vmatprep.subr.mxu0 0.0
        %392 = vmatpush1.msra.mxu0 0.0
        %393 = vmatprep.mubr.f32.mxu0 0.0
        %394 = vmatmul.mubr.f32.gmra.mrb[0].mxu0 %v234
        %v395 = vpop.f32.mrb[0].mxu0
        %v396 = vadd.f32 0.0, %v395
        %v397 = vpop.f32.mrb[0].mxu0
        %398 = vmatprep.mubr.f32.mxu0 0.0
        %399 = vmatmul.mubr.f32.gmra.mrb[0].mxu0 %v237
        %v400 = vpop.f32.mrb[0].mxu0
        %v401 = vadd.f32 0.0, %v400
        %v402 = vpop.f32.mrb[0].mxu0
        %403 = vmatprep.mubr.f32.mxu0 0.0
        %404 = vmatmul.mubr.f32.gmra.mrb[0].mxu0 %v240
        %v405 = vpop.f32.mrb[0].mxu0
        %v406 = vadd.f32 0.0, %v405
        %v407 = vpop.f32.mrb[0].mxu0
        %408 = vmatprep.mubr.f32.mxu0 0.0
        %409 = vmatmul.mubr.f32.gmra.mrb[0].mxu0 %v243
        %v410 = vpop.f32.mrb[0].mxu0
        %v411 = vadd.f32 0.0, %v410
        %v412 = vpop.f32.mrb[0].mxu0
        %413 = vmatprep.mubr.f32.mxu0 0.0
        %414 = vmatmul.mubr.f32.gmra.mrb[0].mxu0 %v246
        %v415 = vpop.f32.mrb[0].mxu0
        %v416 = vadd.f32 0.0, %v415
        %v417 = vpop.f32.mrb[0].mxu0
        %418 = vmatprep.mubr.f32.mxu0 0.0
        %419 = vmatmul.mubr.f32.gmra.mrb[0].mxu0 %v249
        %v420 = vpop.f32.mrb[0].mxu0
        %v421 = vadd.f32 0.0, %v420
        %v422 = vpop.f32.mrb[0].mxu0
        %423 = vmatprep.mubr.f32.mxu0 0.0
        %424 = vmatmul.mubr.f32.gmra.mrb[0].mxu0 %v252
        %v425 = vpop.f32.mrb[0].mxu0
        %v426 = vadd.f32 0.0, %v425
        %v427 = vpop.f32.mrb[0].mxu0
        %428 = vmatprep.mubr.f32.mxu0 0.0
        %429 = vmatmul.mubr.f32.gmra.mrb[0].mxu0 %v255
        %v430 = vpop.f32.mrb[0].mxu0
        %v431 = vadd.f32 0.0, %v430
        %v432 = vpop.f32.mrb[0].mxu0
        %433 = vmatprep.mubr.f32.mxu0 0.0
        %434 = vmatmul.mubr.f32.gmra.mrb[0].mxu0 %v258
        %v435 = vpop.f32.mrb[0].mxu0
        %v436 = vadd.f32 0.0, %v435
        %v437 = vpop.f32.mrb[0].mxu0
        %438 = vmatprep.mubr.f32.mxu0 0.0
        %439 = vmatmul.mubr.f32.gmra.mrb[0].mxu0 %v261
        %v440 = vpop.f32.mrb[0].mxu0
        %v441 = vadd.f32 0.0, %v440
        %v442 = vpop.f32.mrb[0].mxu0
        %443 = vmatprep.mubr.f32.mxu0 0.0
        %444 = vmatmul.mubr.f32.gmra.mrb[0].mxu0 %v264
        %v445 = vpop.f32.mrb[0].mxu0
        %v446 = vadd.f32 0.0, %v445
        %v447 = vpop.f32.mrb[0].mxu0
        %448 = vmatprep.mubr.f32.mxu0 0.0
        %449 = vmatmul.mubr.f32.gmra.mrb[0].mxu0 %v267
        %v450 = vpop.f32.mrb[0].mxu0
        %v451 = vadd.f32 0.0, %v450
        %v452 = vpop.f32.mrb[0].mxu0
        %453 = vmatprep.mubr.f32.mxu0 0.0
        %454 = vmatmul.mubr.f32.gmra.mrb[0].mxu0 %v270
        %v455 = vpop.f32.mrb[0].mxu0
        %v456 = vadd.f32 0.0, %v455
        %v457 = vpop.f32.mrb[0].mxu0
        %458 = vmatprep.mubr.f32.mxu0 0.0
        %459 = vmatmul.mubr.f32.gmra.mrb[0].mxu0 %v273
        %v460 = vpop.f32.mrb[0].mxu0
        %v461 = vadd.f32 0.0, %v460
        %v462 = vpop.f32.mrb[0].mxu0
        %463 = vmatprep.mubr.f32.mxu0 0.0
        %464 = vmatmul.mubr.f32.gmra.mrb[0].mxu0 %v276
        %v465 = vpop.f32.mrb[0].mxu0
        %v466 = vadd.f32 0.0, %v465
        %v467 = vpop.f32.mrb[0].mxu0
        %468 = vmatprep.mubr.f32.mxu0 0.0
        %469 = vmatmul.mubr.f32.gmra.mrb[0].mxu0 %v279
        %v470 = vpop.f32.mrb[0].mxu0
        %v471 = vadd.f32 0.0, %v470
        %v472 = vpop.f32.mrb[0].mxu0
        %473 = vmatprep.mubr.f32.mxu0 0.0
        %474 = vmatmul.mubr.f32.gmra.mrb[0].mxu0 %v282
        %v475 = vpop.f32.mrb[0].mxu0
        %v476 = vadd.f32 0.0, %v475
        %v477 = vpop.f32.mrb[0].mxu0
        %478 = vmatprep.mubr.f32.mxu0 0.0
        %479 = vmatmul.mubr.f32.gmra.mrb[0].mxu0 %v285
        %v480 = vpop.f32.mrb[0].mxu0
        %v481 = vadd.f32 0.0, %v480
        %v482 = vpop.f32.mrb[0].mxu0
        %483 = vmatprep.mubr.f32.mxu0 0.0
        %484 = vmatmul.mubr.f32.gmra.mrb[0].mxu0 %v288
        %v485 = vpop.f32.mrb[0].mxu0
        %v486 = vadd.f32 0.0, %v485
        %v487 = vpop.f32.mrb[0].mxu0
        %488 = vmatprep.mubr.f32.mxu0 0.0
        %489 = vmatmul.mubr.f32.gmra.mrb[0].mxu0 %v291
        %v490 = vpop.f32.mrb[0].mxu0
        %v491 = vadd.f32 0.0, %v490
        %v492 = vpop.f32.mrb[0].mxu0
        %493 = vmatprep.mubr.f32.mxu0 0.0
        %494 = vmatmul.mubr.f32.gmra.mrb[0].mxu0 %v294
        %v495 = vpop.f32.mrb[0].mxu0
        %v496 = vadd.f32 0.0, %v495
        %v497 = vpop.f32.mrb[0].mxu0
        %498 = vmatprep.mubr.f32.mxu0 0.0
        %499 = vmatmul.mubr.f32.gmra.mrb[0].mxu0 %v297
        %v500 = vpop.f32.mrb[0].mxu0
        %v501 = vadd.f32 0.0, %v500
        %v502 = vpop.f32.mrb[0].mxu0
        %503 = vmatprep.mubr.f32.mxu0 0.0
        %504 = vmatmul.mubr.f32.gmra.mrb[0].mxu0 %v300
        %v505 = vpop.f32.mrb[0].mxu0
        %v506 = vadd.f32 0.0, %v505
        %v507 = vpop.f32.mrb[0].mxu0
        %508 = vmatprep.mubr.f32.mxu0 0.0
        %509 = vmatmul.mubr.f32.gmra.mrb[0].mxu0 %v303
        %v510 = vpop.f32.mrb[0].mxu0
        %v511 = vadd.f32 0.0, %v510
        %v512 = vpop.f32.mrb[0].mxu0
        %513 = vmatprep.mubr.f32.mxu0 0.0
        %514 = vmatmul.mubr.f32.gmra.mrb[0].mxu0 %v306
        %v515 = vpop.f32.mrb[0].mxu0
        %v516 = vadd.f32 0.0, %v515
        %v517 = vpop.f32.mrb[0].mxu0
        %518 = vmatprep.mubr.f32.mxu0 0.0
        %519 = vmatmul.mubr.f32.gmra.mrb[0].mxu0 %v309
        %v520 = vpop.f32.mrb[0].mxu0
        %v521 = vadd.f32 0.0, %v520
        %v522 = vpop.f32.mrb[0].mxu0
        %523 = vmatprep.mubr.f32.mxu0 0.0
        %524 = vmatmul.mubr.f32.gmra.mrb[0].mxu0 %v312
        %v525 = vpop.f32.mrb[0].mxu0
        %v526 = vadd.f32 0.0, %v525
        %v527 = vpop.f32.mrb[0].mxu0
        %528 = vmatprep.mubr.f32.mxu0 0.0
        %529 = vmatmul.mubr.f32.gmra.mrb[0].mxu0 %v315
        %v530 = vpop.f32.mrb[0].mxu0
        %v531 = vadd.f32 0.0, %v530
        %v532 = vpop.f32.mrb[0].mxu0
        %533 = vmatprep.mubr.f32.mxu0 0.0
        %534 = vmatmul.mubr.f32.gmra.mrb[0].mxu0 %v318
        %v535 = vpop.f32.mrb[0].mxu0
        %v536 = vadd.f32 0.0, %v535
        %v537 = vpop.f32.mrb[0].mxu0
        %538 = vmatprep.mubr.f32.mxu0 0.0
        %539 = vmatmul.mubr.f32.gmra.mrb[0].mxu0 %v321
        %v540 = vpop.f32.mrb[0].mxu0
        %v541 = vadd.f32 0.0, %v540
        %v542 = vpop.f32.mrb[0].mxu0
        %543 = vmatprep.mubr.f32.mxu0 0.0
        %544 = vmatmul.mubr.f32.gmra.mrb[0].mxu0 %v324
        %v545 = vpop.f32.mrb[0].mxu0
        %v546 = vadd.f32 0.0, %v545
        %v547 = vpop.f32.mrb[0].mxu0
        %548 = vmatprep.mubr.f32.mxu0 0.0
        %549 = vmatmul.mubr.f32.gmra.mrb[0].mxu0 %v327
        %v550 = vpop.f32.mrb[0].mxu0
        %v551 = vadd.f32 0.0, %v550
        %v552 = vpop.f32.mrb[0].mxu0
        %553 = vdwg.mxu0
        %554 = vst [vmem:[#allocation2] sm:$0xff] %v396
        %555 = vst [vmem:[#allocation2 + $0x8] sm:$0xff] %v401
        %556 = vst [vmem:[#allocation2 + $0x10] sm:$0xff] %v406
        %557 = vst [vmem:[#allocation2 + $0x18] sm:$0xff] %v411
        %558 = vst [vmem:[#allocation2 + $0x20] sm:$0xff] %v416
        %559 = vst [vmem:[#allocation2 + $0x28] sm:$0xff] %v421
        %560 = vst [vmem:[#allocation2 + $0x30] sm:$0xff] %v426
        %561 = vst [vmem:[#allocation2 + $0x38] sm:$0xff] %v431
        %562 = vst [vmem:[#allocation2 + $0x40] sm:$0xff] %v436
        %563 = vst [vmem:[#allocation2 + $0x48] sm:$0xff] %v441
        %564 = vst [vmem:[#allocation2 + $0x50] sm:$0xff] %v446
        %565 = vst [vmem:[#allocation2 + $0x58] sm:$0xff] %v451
        %566 = vst [vmem:[#allocation2 + $0x60] sm:$0xff] %v456
        %567 = vst [vmem:[#allocation2 + $0x68] sm:$0xff] %v461
        %568 = vst [vmem:[#allocation2 + $0x70] sm:$0xff] %v466
        %569 = vst [vmem:[#allocation2 + $0x78] sm:$0xff] %v471
        %570 = vst [vmem:[#allocation2 + $0x80] sm:$0xff] %v476
        %571 = vst [vmem:[#allocation2 + $0x88] sm:$0xff] %v481
        %572 = vst [vmem:[#allocation2 + $0x90] sm:$0xff] %v486
        %573 = vst [vmem:[#allocation2 + $0x98] sm:$0xff] %v491
        %574 = vst [vmem:[#allocation2 + $0xa0] sm:$0xff] %v496
        %575 = vst [vmem:[#allocation2 + $0xa8] sm:$0xff] %v501
        %576 = vst [vmem:[#allocation2 + $0xb0] sm:$0xff] %v506
        %577 = vst [vmem:[#allocation2 + $0xb8] sm:$0xff] %v511
        %578 = vst [vmem:[#allocation2 + $0xc0] sm:$0xff] %v516
        %579 = vst [vmem:[#allocation2 + $0xc8] sm:$0xff] %v521
        %580 = vst [vmem:[#allocation2 + $0xd0] sm:$0xff] %v526
        %581 = vst [vmem:[#allocation2 + $0xd8] sm:$0xff] %v531
        %582 = vst [vmem:[#allocation2 + $0xe0] sm:$0xff] %v536
        %583 = vst [vmem:[#allocation2 + $0xe8] sm:$0xff] %v541
        %584 = vst [vmem:[#allocation2 + $0xf0] sm:$0xff] %v546
        %585 = vst [vmem:[#allocation2 + $0xf8] sm:$0xff] %v551
        loop: start=0, step=1, limit=32
        $region37: #{tpu_custom_call.1} parent=31 // loop_pre_header
          _
        $region38: #{tpu_custom_call.1} parent=31 // loop_header
          %s587 = sphi 0, %s591
          %p588 = scmp.ge.s32.totalorder %s587, 32
        $region39: #{tpu_custom_call.1} parent=31 // loop_header_branch
          %590 = sbr.rel (%p588) target = $region43
        $region40: #{tpu_custom_call.1} parent=31 // loop_body
          %s592 = smul.u32 %s587, 8
          %s593 = sadd.s32 %s191, %s592
          %s594 = sld [smem:[#allocation5 + %s593]]
          %s595 = scalar_lea.vmem %s2, %s594
          %v596 = vld [vmem:[%s595] sm:$0x1]
          %s597 = scalar_lea.vmem [#allocation3], %s592
          %598 = vst [vmem:[%s597] sm:$0x1] %v596
          %s599 = sadd.s32 %s593, 1
          %s600 = sld [smem:[#allocation5 + %s599]]
          %s601 = scalar_lea.vmem %s2, %s600
          %v602 = vld [vmem:[%s601] sm:$0x1]
          %s603 = sadd.s32 %s592, 1
          %s604 = scalar_lea.vmem [#allocation3], %s603
          %605 = vst [vmem:[%s604] sm:$0x1] %v602
          %s606 = sadd.s32 %s593, 2
          %s607 = sld [smem:[#allocation5 + %s606]]
          %s608 = scalar_lea.vmem %s2, %s607
          %v609 = vld [vmem:[%s608] sm:$0x1]
          %s610 = sadd.s32 %s592, 2
          %s611 = scalar_lea.vmem [#allocation3], %s610
          %612 = vst [vmem:[%s611] sm:$0x1] %v609
          %s613 = sadd.s32 %s593, 3
          %s614 = sld [smem:[#allocation5 + %s613]]
          %s615 = scalar_lea.vmem %s2, %s614
          %v616 = vld [vmem:[%s615] sm:$0x1]
          %s617 = sadd.s32 %s592, 3
          %s618 = scalar_lea.vmem [#allocation3], %s617
          %619 = vst [vmem:[%s618] sm:$0x1] %v616
          %s620 = sadd.s32 %s593, 4
          %s621 = sld [smem:[#allocation5 + %s620]]
          %s622 = scalar_lea.vmem %s2, %s621
          %v623 = vld [vmem:[%s622] sm:$0x1]
          %s624 = sadd.s32 %s592, 4
          %s625 = scalar_lea.vmem [#allocation3], %s624
          %626 = vst [vmem:[%s625] sm:$0x1] %v623
          %s627 = sadd.s32 %s593, 5
          %s628 = sld [smem:[#allocation5 + %s627]]
          %s629 = scalar_lea.vmem %s2, %s628
          %v630 = vld [vmem:[%s629] sm:$0x1]
          %s631 = sadd.s32 %s592, 5
          %s632 = scalar_lea.vmem [#allocation3], %s631
          %633 = vst [vmem:[%s632] sm:$0x1] %v630
          %s634 = sadd.s32 %s593, 6
          %s635 = sld [smem:[#allocation5 + %s634]]
          %s636 = scalar_lea.vmem %s2, %s635
          %v637 = vld [vmem:[%s636] sm:$0x1]
          %s638 = sadd.s32 %s592, 6
          %s639 = scalar_lea.vmem [#allocation3], %s638
          %640 = vst [vmem:[%s639] sm:$0x1] %v637
          %s641 = sadd.s32 %s593, 7
          %s642 = sld [smem:[#allocation5 + %s641]]
          %s643 = scalar_lea.vmem %s2, %s642
          %v644 = vld [vmem:[%s643] sm:$0x1]
          %s645 = sadd.s32 %s592, 7
          %s646 = scalar_lea.vmem [#allocation3], %s645
          %647 = vst [vmem:[%s646] sm:$0x1] %v644
        $region41: #{tpu_custom_call.1} parent=31 // loop_footer
          %s591 = sadd.s32 1, %s587
        $region42: #{tpu_custom_call.1} parent=31 // loop_footer_branch
          %586 = sbr.rel target = $region38
        $region43: #{tpu_custom_call.1} parent=31 // loop_exit
          _
        %v648 = vld [vmem:[#allocation3] sm:$0xff]
        %v649 = vld [vmem:[#allocation3 + $0x8] sm:$0xff]
        %v650 = vld [vmem:[#allocation3 + $0x10] sm:$0xff]
        %v651 = vld [vmem:[#allocation3 + $0x18] sm:$0xff]
        %v652 = vld [vmem:[#allocation3 + $0x20] sm:$0xff]
        %v653 = vld [vmem:[#allocation3 + $0x28] sm:$0xff]
        %v654 = vld [vmem:[#allocation3 + $0x30] sm:$0xff]
        %v655 = vld [vmem:[#allocation3 + $0x38] sm:$0xff]
        %v656 = vld [vmem:[#allocation3 + $0x40] sm:$0xff]
        %v657 = vld [vmem:[#allocation3 + $0x48] sm:$0xff]
        %v658 = vld [vmem:[#allocation3 + $0x50] sm:$0xff]
        %v659 = vld [vmem:[#allocation3 + $0x58] sm:$0xff]
        %v660 = vld [vmem:[#allocation3 + $0x60] sm:$0xff]
        %v661 = vld [vmem:[#allocation3 + $0x68] sm:$0xff]
        %v662 = vld [vmem:[#allocation3 + $0x70] sm:$0xff]
        %v663 = vld [vmem:[#allocation3 + $0x78] sm:$0xff]
        %v664 = vld [vmem:[#allocation3 + $0x80] sm:$0xff]
        %v665 = vld [vmem:[#allocation3 + $0x88] sm:$0xff]
        %v666 = vld [vmem:[#allocation3 + $0x90] sm:$0xff]
        %v667 = vld [vmem:[#allocation3 + $0x98] sm:$0xff]
        %v668 = vld [vmem:[#allocation3 + $0xa0] sm:$0xff]
        %v669 = vld [vmem:[#allocation3 + $0xa8] sm:$0xff]
        %v670 = vld [vmem:[#allocation3 + $0xb0] sm:$0xff]
        %v671 = vld [vmem:[#allocation3 + $0xb8] sm:$0xff]
        %v672 = vld [vmem:[#allocation3 + $0xc0] sm:$0xff]
        %v673 = vld [vmem:[#allocation3 + $0xc8] sm:$0xff]
        %v674 = vld [vmem:[#allocation3 + $0xd0] sm:$0xff]
        %v675 = vld [vmem:[#allocation3 + $0xd8] sm:$0xff]
        %v676 = vld [vmem:[#allocation3 + $0xe0] sm:$0xff]
        %v677 = vld [vmem:[#allocation3 + $0xe8] sm:$0xff]
        %v678 = vld [vmem:[#allocation3 + $0xf0] sm:$0xff]
        %v679 = vld [vmem:[#allocation3 + $0xf8] sm:$0xff]
        %v680 = vld [vmem:[#allocation2] sm:$0xff]
        %v681 = vld [vmem:[#allocation2 + $0x8] sm:$0xff]
        %v682 = vld [vmem:[#allocation2 + $0x10] sm:$0xff]
        %v683 = vld [vmem:[#allocation2 + $0x18] sm:$0xff]
        %v684 = vld [vmem:[#allocation2 + $0x20] sm:$0xff]
        %v685 = vld [vmem:[#allocation2 + $0x28] sm:$0xff]
        %v686 = vld [vmem:[#allocation2 + $0x30] sm:$0xff]
        %v687 = vld [vmem:[#allocation2 + $0x38] sm:$0xff]
        %v688 = vld [vmem:[#allocation2 + $0x40] sm:$0xff]
        %v689 = vld [vmem:[#allocation2 + $0x48] sm:$0xff]
        %v690 = vld [vmem:[#allocation2 + $0x50] sm:$0xff]
        %v691 = vld [vmem:[#allocation2 + $0x58] sm:$0xff]
        %v692 = vld [vmem:[#allocation2 + $0x60] sm:$0xff]
        %v693 = vld [vmem:[#allocation2 + $0x68] sm:$0xff]
        %v694 = vld [vmem:[#allocation2 + $0x70] sm:$0xff]
        %v695 = vld [vmem:[#allocation2 + $0x78] sm:$0xff]
        %v696 = vld [vmem:[#allocation2 + $0x80] sm:$0xff]
        %v697 = vld [vmem:[#allocation2 + $0x88] sm:$0xff]
        %v698 = vld [vmem:[#allocation2 + $0x90] sm:$0xff]
        %v699 = vld [vmem:[#allocation2 + $0x98] sm:$0xff]
        %v700 = vld [vmem:[#allocation2 + $0xa0] sm:$0xff]
        %v701 = vld [vmem:[#allocation2 + $0xa8] sm:$0xff]
        %v702 = vld [vmem:[#allocation2 + $0xb0] sm:$0xff]
        %v703 = vld [vmem:[#allocation2 + $0xb8] sm:$0xff]
        %v704 = vld [vmem:[#allocation2 + $0xc0] sm:$0xff]
        %v705 = vld [vmem:[#allocation2 + $0xc8] sm:$0xff]
        %v706 = vld [vmem:[#allocation2 + $0xd0] sm:$0xff]
        %v707 = vld [vmem:[#allocation2 + $0xd8] sm:$0xff]
        %v708 = vld [vmem:[#allocation2 + $0xe0] sm:$0xff]
        %v709 = vld [vmem:[#allocation2 + $0xe8] sm:$0xff]
        %v710 = vld [vmem:[#allocation2 + $0xf0] sm:$0xff]
        %v711 = vld [vmem:[#allocation2 + $0xf8] sm:$0xff]
        %v712 = vmul.f32 %v648, %v680
        %v713 = vmul.f32 %v649, %v681
        %v714 = vmul.f32 %v650, %v682
        %v715 = vmul.f32 %v651, %v683
        %v716 = vmul.f32 %v652, %v684
        %v717 = vmul.f32 %v653, %v685
        %v718 = vmul.f32 %v654, %v686
        %v719 = vmul.f32 %v655, %v687
        %v720 = vmul.f32 %v656, %v688
        %v721 = vmul.f32 %v657, %v689
        %v722 = vmul.f32 %v658, %v690
        %v723 = vmul.f32 %v659, %v691
        %v724 = vmul.f32 %v660, %v692
        %v725 = vmul.f32 %v661, %v693
        %v726 = vmul.f32 %v662, %v694
        %v727 = vmul.f32 %v663, %v695
        %v728 = vmul.f32 %v664, %v696
        %v729 = vmul.f32 %v665, %v697
        %v730 = vmul.f32 %v666, %v698
        %v731 = vmul.f32 %v667, %v699
        %v732 = vmul.f32 %v668, %v700
        %v733 = vmul.f32 %v669, %v701
        %v734 = vmul.f32 %v670, %v702
        %v735 = vmul.f32 %v671, %v703
        %v736 = vmul.f32 %v672, %v704
        %v737 = vmul.f32 %v673, %v705
        %v738 = vmul.f32 %v674, %v706
        %v739 = vmul.f32 %v675, %v707
        %v740 = vmul.f32 %v676, %v708
        %v741 = vmul.f32 %v677, %v709
        %v742 = vmul.f32 %v678, %v710
        %v743 = vmul.f32 %v679, %v711
        %744 = vst [vmem:[#allocation3] sm:$0xff] %v712
        %745 = vst [vmem:[#allocation3 + $0x8] sm:$0xff] %v713
        %746 = vst [vmem:[#allocation3 + $0x10] sm:$0xff] %v714
        %747 = vst [vmem:[#allocation3 + $0x18] sm:$0xff] %v715
        %748 = vst [vmem:[#allocation3 + $0x20] sm:$0xff] %v716
        %749 = vst [vmem:[#allocation3 + $0x28] sm:$0xff] %v717
        %750 = vst [vmem:[#allocation3 + $0x30] sm:$0xff] %v718
        %751 = vst [vmem:[#allocation3 + $0x38] sm:$0xff] %v719
        %752 = vst [vmem:[#allocation3 + $0x40] sm:$0xff] %v720
        %753 = vst [vmem:[#allocation3 + $0x48] sm:$0xff] %v721
        %754 = vst [vmem:[#allocation3 + $0x50] sm:$0xff] %v722
        %755 = vst [vmem:[#allocation3 + $0x58] sm:$0xff] %v723
        %756 = vst [vmem:[#allocation3 + $0x60] sm:$0xff] %v724
        %757 = vst [vmem:[#allocation3 + $0x68] sm:$0xff] %v725
        %758 = vst [vmem:[#allocation3 + $0x70] sm:$0xff] %v726
        %759 = vst [vmem:[#allocation3 + $0x78] sm:$0xff] %v727
        %760 = vst [vmem:[#allocation3 + $0x80] sm:$0xff] %v728
        %761 = vst [vmem:[#allocation3 + $0x88] sm:$0xff] %v729
        %762 = vst [vmem:[#allocation3 + $0x90] sm:$0xff] %v730
        %763 = vst [vmem:[#allocation3 + $0x98] sm:$0xff] %v731
        %764 = vst [vmem:[#allocation3 + $0xa0] sm:$0xff] %v732
        %765 = vst [vmem:[#allocation3 + $0xa8] sm:$0xff] %v733
        %766 = vst [vmem:[#allocation3 + $0xb0] sm:$0xff] %v734
        %767 = vst [vmem:[#allocation3 + $0xb8] sm:$0xff] %v735
        %768 = vst [vmem:[#allocation3 + $0xc0] sm:$0xff] %v736
        %769 = vst [vmem:[#allocation3 + $0xc8] sm:$0xff] %v737
        %770 = vst [vmem:[#allocation3 + $0xd0] sm:$0xff] %v738
        %771 = vst [vmem:[#allocation3 + $0xd8] sm:$0xff] %v739
        %772 = vst [vmem:[#allocation3 + $0xe0] sm:$0xff] %v740
        %773 = vst [vmem:[#allocation3 + $0xe8] sm:$0xff] %v741
        %774 = vst [vmem:[#allocation3 + $0xf0] sm:$0xff] %v742
        %775 = vst [vmem:[#allocation3 + $0xf8] sm:$0xff] %v743
        loop: start=0, step=1, limit=256
        $region44: #{tpu_custom_call.1} parent=31 // loop_pre_header
          _
        $region45: #{tpu_custom_call.1} parent=31 // loop_header
          %s777 = sphi 0, %s781
          %p778 = scmp.ge.s32.totalorder %s777, 256
        $region46: #{tpu_custom_call.1} parent=31 // loop_header_branch
          %780 = sbr.rel (%p778) target = $region50
        $region47: #{tpu_custom_call.1} parent=31 // loop_body
          %s782 = sadd.s32 %s191, %s777
          %s783 = sld [smem:[#allocation6 + %s782]]
          %s784 = scalar_lea.vmem [#allocation7], %s783
          %v785 = vld [vmem:[%s784] sm:$0x1]
          %s786 = scalar_lea.vmem [#allocation3], %s777
          %v787 = vld [vmem:[%s786] sm:$0x1]
          %v788 = vadd.f32 %v785, %v787
          %789 = vst [vmem:[%s784] sm:$0x1] %v788
        $region48: #{tpu_custom_call.1} parent=31 // loop_footer
          %s781 = sadd.s32 1, %s777
        $region49: #{tpu_custom_call.1} parent=31 // loop_footer_branch
          %776 = sbr.rel target = $region45
        $region50: #{tpu_custom_call.1} parent=31 // loop_exit
          _
        // Predicated region
        $region51: #{tpu_custom_call.1} parent=31 // pred_check
          %p790 = pneg %p108
        $region52: #{tpu_custom_call.1} parent=31 // pred_check_branch
          %792 = sbr.rel (%p790) target = $region54
        $region53: #{tpu_custom_call.1} parent=31 // pred_region
          %s794 = ssub.s32 2048, 2048
          %795 = vsyncadd [#allocation8], %s794
          %s796 = sshll.u32 [#allocation7], 4
          %s797 = int_to_ptr.vmem [resolvable:$true] %s796
          %802 = dma.vmem_to_hbm [thread:$0]  %s797, 2048, %s5, [#allocation8], 128, 128, 8
        $region54: #{tpu_custom_call.1} parent=31 // pred_fallthru
          _
        // Predicated region
        $region55: #{tpu_custom_call.1} parent=31 // pred_check
          %p803 = pneg %p108
        $region56: #{tpu_custom_call.1} parent=31 // pred_check_branch
          %805 = sbr.rel (%p803) target = $region58
        $region57: #{tpu_custom_call.1} parent=31 // pred_region
          %806 = dma.done [#allocation8], 2048
        $region58: #{tpu_custom_call.1} parent=31 // pred_fallthru
          _
      $region32: #{tpu_custom_call.1} parent=5 // pred_fallthru
        _
      %p807 = scmp.le.s32.totalorder 2, %s22
      // Predicated region
      $region59: #{tpu_custom_call.1} parent=5 // pred_check
        %p808 = pneg %p807
      $region60: #{tpu_custom_call.1} parent=5 // pred_check_branch
        %810 = sbr.rel (%p808) target = $region62
      $region61: #{tpu_custom_call.1} parent=5 // pred_region
        %s811 = ssub.s32 %s22, 2
      $region62: #{tpu_custom_call.1} parent=5 // pred_fallthru
        _
    $region6: #{tpu_custom_call.1} parent=1 // loop_footer
      %s26 = sadd.s32 1, %s22
    $region7: #{tpu_custom_call.1} parent=1 // loop_footer_branch
      %21 = sbr.rel target = $region3
    $region8: #{tpu_custom_call.1} parent=1 // loop_exit
      _
    %812 = vsyncpa [#allocation8], 1
    %s813 = scalar_lea.sflag [#allocation8], 1
    %814 = vsyncpa %s813, 1

</llo_original>
